<compile_context>
chip_gen: v7x
topology: tpu7x:2x2x1
jax: 0.10.0
libtpu: 0.0.40
codegen_flags: <defaults>
</compile_context>

<pallas_src>
import jax
import jax.numpy as jnp
from jax import lax
from jax.experimental import pallas as pl
from jax.experimental.pallas import tpu as pltpu


# ---------------------------------------------------------------------------
# Pallas kernel: attention gate on (C, TM) lane-dense tiles
# ---------------------------------------------------------------------------
def _attention_gate_kernel(g_ref, x_ref, wg_ref, wx_ref, b_ref,
                           wpsi_ref, bpsi_ref, o_ref):
    # g_ref: (F_g, TM) bf16, x_ref: (F_l, TM) bf16 -> fed straight to the MXU
    # (no f32 upcast of the big tiles), f32 accumulation.
    h = (jnp.dot(wg_ref[...], g_ref[...], preferred_element_type=jnp.float32)
         + jnp.dot(wx_ref[...], x_ref[...], preferred_element_type=jnp.float32)
         + b_ref[...])                                       # (F_int, TM) f32
    a = jnp.maximum(h, 0.0)                                  # relu
    # psi (1x1 conv to 1 channel + BN + sigmoid): VPU multiply + sublane
    # reduce (XLU) instead of an N=1 MXU matmul; stays lane-dense (1, TM).
    psi = jax.nn.sigmoid(
        jnp.sum(a * wpsi_ref[...], axis=0, keepdims=True) + bpsi_ref[...])
    # Gate: broadcast (1, TM) over the x tile; lane-dense (F_l, TM) store.
    o_ref[...] = (x_ref[...].astype(jnp.float32) * psi).astype(o_ref.dtype)


# ---------------------------------------------------------------------------
# Tile-size selection
# ---------------------------------------------------------------------------
def _tile_vmem_bytes(tm, f_g, f_l, f_int):
    """Rough VMEM estimate: double-buffered bf16 inputs + f32 output + temps."""
    act, out = 2, 4
    io = 2 * ((f_g + f_l) * tm * act + f_l * tm * out)
    inter = (2 * f_int + 1 + f_l) * tm * 4
    return io + inter


def _pick_tm(hw, n, f_g, f_l, f_int, *, tm_max=4096, min_steps=8,
             vmem_budget=12 << 20):
    """Lane tile for the HW axis.

    Prefers a divisor of hw (multiple of 128 -> no pad, unmasked stores), as
    large as possible while the total grid (n * hw/tm) keeps >= min_steps
    steps (>= 2 per v7x TensorCore so the pipeline still double-buffers) and
    the per-tile VMEM estimate stays under a v5e-safe budget.
    """
    if hw % 128 != 0:
        # Ragged spatial extent: use the whole row as one full-extent block.
        # TODO(synk): switch to a masked last tile for very large ragged HW.
        return hw
    cands = [t for t in range(128, min(hw, tm_max) + 1, 128)
             if hw % t == 0 and _tile_vmem_bytes(t, f_g, f_l, f_int) <= vmem_budget]
    if not cands:
        return 128
    for want in (min_steps, 4, 2, 1):
        ok = [t for t in cands if n * (hw // t) >= want]
        if ok:
            return max(ok)
    return min(cands)


# ---------------------------------------------------------------------------
# Conv+BN folding and parameter containers (eval-mode BN, synthetic weights)
# ---------------------------------------------------------------------------
def fold_conv_bn(w, b, gamma, beta, mean, var, eps=1e-5):
    """Fold Conv2d(1x1)+BatchNorm2d (eval) into one affine.
    w: (C_in, C_out), b: (C_out,) -> (w_eff (C_in, C_out), b_eff (C_out,))."""
    scale = gamma / jnp.sqrt(var + eps)
    shift = beta - mean * scale
    return (w * scale[None, :]).astype(jnp.float32), (b * scale + shift).astype(jnp.float32)


class AttentionGateParams:
    def __init__(self, key, F_g, F_l, F_int):
        ks = jax.random.split(key, 14)
        f = lambda k, s: jax.random.normal(k, s, jnp.float32) * 0.1
        # W_g: Conv2d(F_g, F_int, 1) + BN(F_int)
        self.wg = f(ks[0], (F_g, F_int)); self.bg = f(ks[1], (F_int,))
        self.g_gamma = 1.0 + f(ks[2], (F_int,)); self.g_beta = f(ks[3], (F_int,))
        self.g_mean = f(ks[4], (F_int,)); self.g_var = 1.0 + jnp.abs(f(ks[5], (F_int,)))
        # W_x: Conv2d(F_l, F_int, 1) + BN(F_int)
        self.wx = f(ks[6], (F_l, F_int)); self.bx = f(ks[7], (F_int,))
        self.x_gamma = 1.0 + f(ks[8], (F_int,)); self.x_beta = f(ks[9], (F_int,))
        self.x_mean = f(ks[10], (F_int,)); self.x_var = 1.0 + jnp.abs(f(ks[11], (F_int,)))
        # psi: Conv2d(F_int, 1, 1) + BN(1) + Sigmoid
        self.wpsi = f(ks[12], (F_int, 1)); self.bpsi = f(ks[13], (1,))
        self.p_gamma = jnp.ones((1,), jnp.float32); self.p_beta = jnp.zeros((1,), jnp.float32)
        self.p_mean = jnp.zeros((1,), jnp.float32); self.p_var = jnp.ones((1,), jnp.float32)

    def fused(self, act_dtype=jnp.bfloat16):
        wg, bg = fold_conv_bn(self.wg, self.bg, self.g_gamma, self.g_beta,
                              self.g_mean, self.g_var)
        wx, bx = fold_conv_bn(self.wx, self.bx, self.x_gamma, self.x_beta,
                              self.x_mean, self.x_var)
        wpsi, bpsi = fold_conv_bn(self.wpsi, self.bpsi, self.p_gamma,
                                  self.p_beta, self.p_mean, self.p_var)
        # Left-matmul weights in bf16 (native MXU path), biases pre-summed f32,
        # psi weight/bias kept f32 (tiny; used on the VPU).
        wg_m = wg.T.astype(act_dtype)                       # (F_int, F_g)
        wx_m = wx.T.astype(act_dtype)                       # (F_int, F_l)
        b_m = (bg + bx).reshape(-1, 1).astype(jnp.float32)  # (F_int, 1)
        return (wg_m, wx_m, b_m,
                wpsi.astype(jnp.float32),                   # (F_int, 1)
                bpsi.reshape(1, 1).astype(jnp.float32))     # (1, 1)


class UpParams:
    """Synthetic parameters for Up(in_channels, out_channels, bilinear=False)."""

    def __init__(self, key, in_channels, out_channels):
        c_half = in_channels // 2
        mid = out_channels  # DoubleConv(in_channels, out_channels): mid = out
        ks = jax.random.split(key, 12)
        f = lambda k, s: jax.random.normal(k, s, jnp.float32) * 0.1
        # ConvTranspose2d(in_channels, in_channels//2, kernel_size=2, stride=2)
        self.up_w = f(ks[0], (in_channels, c_half, 2, 2))
        self.up_b = f(ks[1], (c_half,))
        # AttentionGate(F_g=in//2, F_l=in//2, F_int=in//4)
        self.att = AttentionGateParams(ks[2], c_half, c_half, in_channels // 4)
        # DoubleConv: Conv3x3(no bias)+BN+ReLU, twice
        self.c1_w = f(ks[3], (mid, in_channels, 3, 3))
        self.c1_gamma = 1.0 + f(ks[4], (mid,)); self.c1_beta = f(ks[5], (mid,))
        self.c1_mean = f(ks[6], (mid,)); self.c1_var = 1.0 + jnp.abs(f(ks[7], (mid,)))
        self.c2_w = f(ks[8], (out_channels, mid, 3, 3))
        self.c2_gamma = 1.0 + f(ks[9], (out_channels,)); self.c2_beta = f(ks[10], (out_channels,))
        self.c2_mean = f(ks[11], (out_channels,))
        self.c2_var = jnp.ones((out_channels,), jnp.float32)


# ---------------------------------------------------------------------------
# Attention gate: Pallas wrapper (NCHW in/out, zero transposes) + reference
# ---------------------------------------------------------------------------
def attention_gate_nchw(g, x, params, *, act_dtype=jnp.bfloat16, tm=None):
    """g: (N, F_g, H, W), x: (N, F_l, H, W) -> x * psi, (N, F_l, H, W)."""
    N, F_g, H, W = g.shape
    _, F_l, _, _ = x.shape
    HW = H * W
    wg, wx, b, wpsi, bpsi = params.fused(act_dtype)
    F_int = wg.shape[0]
    # (N, C, H, W) -> (N, C, HW): free views, no transposes / no concat / no pad.
    g3 = g.reshape(N, F_g, HW).astype(act_dtype)
    x3 = x.reshape(N, F_l, HW).astype(act_dtype)
    if tm is None:
        tm = _pick_tm(HW, N, F_g, F_l, F_int)
    grid = (N, HW // tm)
    const = lambda n, i: (0, 0)   # resident parameter blocks

    out = pl.pallas_call(
        _attention_gate_kernel,
        out_shape=jax.ShapeDtypeStruct((N, F_l, HW), x.dtype),
        grid_spec=pltpu.PrefetchScalarGridSpec(
            num_scalar_prefetch=0,
            grid=grid,
            in_specs=[
                pl.BlockSpec((pl.Squeezed(), F_g, tm), lambda n, i: (n, 0, i)),
                pl.BlockSpec((pl.Squeezed(), F_l, tm), lambda n, i: (n, 0, i)),
                pl.BlockSpec((F_int, F_g), const),   # folded W_g (bf16)
                pl.BlockSpec((F_int, F_l), const),   # folded W_x (bf16)
                pl.BlockSpec((F_int, 1), const),     # pre-summed bias (f32)
                pl.BlockSpec((F_int, 1), const),     # psi weight column (f32)
                pl.BlockSpec((1, 1), const),         # psi bias (f32)
            ],
            out_specs=pl.BlockSpec((pl.Squeezed(), F_l, tm),
                                   lambda n, i: (n, 0, i)),
        ),
        compiler_params=pltpu.CompilerParams(
            dimension_semantics=("parallel", "parallel")),
    )(g3, x3, wg, wx, b, wpsi, bpsi)
    return out.reshape(N, F_l, H, W)


def attention_gate_ref(g, x, params, *, act_dtype=jnp.bfloat16):
    """Pure-JAX reference (same folded bf16 weights, same bf16 activations)."""
    N, F_g, H, W = g.shape
    _, F_l, _, _ = x.shape
    wg, wx, b, wpsi, bpsi = params.fused(act_dtype)
    g_f = g.reshape(N, F_g, -1).astype(act_dtype).astype(jnp.float32)
    x_f = x.reshape(N, F_l, -1).astype(act_dtype).astype(jnp.float32)
    h = (jnp.einsum('ij,njm->nim', wg.astype(jnp.float32), g_f)
         + jnp.einsum('ij,njm->nim', wx.astype(jnp.float32), x_f)
         + b[None])
    a = jnp.maximum(h, 0.0)
    psi = jax.nn.sigmoid(jnp.sum(a * wpsi[None], axis=1, keepdims=True) + bpsi[None])
    out = x_f * psi
    return out.reshape(N, F_l, H, W).astype(x.dtype)


# ---------------------------------------------------------------------------
# The rest of Up (plain JAX/XLA around the Pallas attention gate)
# ---------------------------------------------------------------------------
def conv_transpose_2x2_s2(x, w, b):
    """ConvTranspose2d(C_in, C_out, kernel_size=2, stride=2). w: (C_in, C_out, 2, 2)."""
    N, _, H, W = x.shape
    y = jnp.einsum('nchw,codt->nohdwt', x, w).reshape(N, w.shape[1], 2 * H, 2 * W)
    return y + b[None, :, None, None]


def conv3x3_bn_relu(x, w, gamma, beta, mean, var, eps=1e-5):
    """Conv2d(3x3, pad=1, no bias) + eval-mode BN (folded affine) + ReLU."""
    y = lax.conv_general_dilated(
        x, w, window_strides=(1, 1), padding=((1, 1), (1, 1)),
        dimension_numbers=('NCHW', 'OIHW', 'NCHW'))
    scale = gamma / jnp.sqrt(var + eps)
    shift = beta - mean * scale
    y = y * scale[None, :, None, None] + shift[None, :, None, None]
    return jnp.maximum(y, 0.0)


def up_forward(x1, x2, p, *, use_pallas=True, act_dtype=jnp.bfloat16):
    """Up.forward(x1, x2) for the working bilinear=False configuration."""
    # TODO(synk): the bilinear=True branch of the PyTorch module has inconsistent
    # channel counts (Upsample keeps in_channels while AttentionGate/DoubleConv
    # expect in_channels//2); only the ConvTranspose2d path is implemented.
    x1u = conv_transpose_2x2_s2(x1, p.up_w, p.up_b)
    dY = x2.shape[2] - x1u.shape[2]
    dX = x2.shape[3] - x1u.shape[3]
    x1u = jnp.pad(x1u, ((0, 0), (0, 0),
                        (dY // 2, dY - dY // 2),
                        (dX // 2, dX - dX // 2)))
    if use_pallas:
        x2a = attention_gate_nchw(x1u, x2, p.att, act_dtype=act_dtype)
    else:
        x2a = attention_gate_ref(x1u, x2, p.att, act_dtype=act_dtype)
    xc = jnp.concatenate([x2a, x1u], axis=1)
    # TODO(synk): the 3x3 DoubleConv is left to XLA (lax.conv); it is not a
    # 1x1/matmul pattern, so it is not ported to Pallas here.
    y = conv3x3_bn_relu(xc, p.c1_w, p.c1_gamma, p.c1_beta, p.c1_mean, p.c1_var)
    y = conv3x3_bn_relu(y, p.c2_w, p.c2_gamma, p.c2_beta, p.c2_mean, p.c2_var)
    return y


if __name__ == "__main__":
    key = jax.random.PRNGKey(0)
    k1, k2, kp = jax.random.split(key, 3)

    # Shapes consistent with Up(in_channels=8, out_channels=4, bilinear=False):
    #   x1: (2, 8, 8, 8)  (low-res features), x2: (2, 4, 16, 16) (skip connection)
    in_channels, out_channels = 8, 4
    N, H, W = 2, 8, 8
    x1 = jax.random.normal(k1, (N, in_channels, H, W), jnp.float32)
    x2 = jax.random.normal(k2, (N, in_channels // 2, 2 * H, 2 * W), jnp.float32)
    params = UpParams(kp, in_channels, out_channels)

    # 1) Check the Pallas attention-gate kernel against its pure-JAX reference.
    g_test = conv_transpose_2x2_s2(x1, params.up_w, params.up_b)
    att_out = jax.block_until_ready(attention_gate_nchw(g_test, x2, params.att))
    att_ref = attention_gate_ref(g_test, x2, params.att)
    assert att_out.shape == x2.shape
    assert jnp.allclose(att_out, att_ref, atol=2e-2, rtol=2e-2), "attention gate mismatch"

    # 2) Full Up forward (upsample -> pad -> attention (Pallas) -> concat -> DoubleConv).
    out = jax.block_until_ready(up_forward(x1, x2, params, use_pallas=True))
    ref = up_forward(x1, x2, params, use_pallas=False)
    assert out.shape == (N, out_channels, 2 * H, 2 * W)
    assert jnp.allclose(out, ref, atol=2e-2, rtol=2e-2), "Up forward mismatch"

    print("KERNEL_OK")
</pallas_src>

<mosaic_0001>
module attributes {stable_mosaic.version = 11 : i64} {
  func.func @_attention_gate_kernel(%arg0: i32, %arg1: i32, %arg2: memref<1x4x128xbf16, #tpu.memory_space<vmem>>, %arg3: memref<1x4x128xbf16, #tpu.memory_space<vmem>>, %arg4: memref<2x4xbf16, #tpu.memory_space<vmem>>, %arg5: memref<2x4xbf16, #tpu.memory_space<vmem>>, %arg6: memref<2x1xf32, #tpu.memory_space<vmem>>, %arg7: memref<2x1xf32, #tpu.memory_space<vmem>>, %arg8: memref<1x1xf32, #tpu.memory_space<vmem>>, %arg9: memref<1x4x128xf32, #tpu.memory_space<vmem>>) attributes {dimension_semantics = [#tpu.dimension_semantics<parallel>, #tpu.dimension_semantics<parallel>], iteration_bounds = array<i64: 2, 2>, scalar_prefetch = 0 : i64, scratch_operands = 0 : i64, tpu.core_type = #tpu.core_type<tc>, window_params = [{transform_indices = @transform_0, window_bounds = array<i64: 1, 4, 128>}, {transform_indices = @transform_1, window_bounds = array<i64: 1, 4, 128>}, {pipeline_mode = #tpu.pipeline_mode<synchronous>, transform_indices = @transform_2, window_bounds = array<i64: 2, 4>}, {pipeline_mode = #tpu.pipeline_mode<synchronous>, transform_indices = @transform_3, window_bounds = array<i64: 2, 4>}, {pipeline_mode = #tpu.pipeline_mode<synchronous>, transform_indices = @transform_4, window_bounds = array<i64: 2, 1>}, {pipeline_mode = #tpu.pipeline_mode<synchronous>, transform_indices = @transform_5, window_bounds = array<i64: 2, 1>}, {pipeline_mode = #tpu.pipeline_mode<synchronous>, transform_indices = @transform_6, window_bounds = array<i64: 1, 1>}, {transform_indices = @transform_7, window_bounds = array<i64: 1, 4, 128>}]} {
    %c0 = arith.constant 0 : index
    %c0_0 = arith.constant 0 : index
    %0 = vector.load %arg4[%c0, %c0_0] : memref<2x4xbf16, #tpu.memory_space<vmem>>, vector<2x4xbf16>
    %c0_1 = arith.constant 0 : index
    %c0_2 = arith.constant 0 : index
    %c0_3 = arith.constant 0 : index
    %1 = vector.load %arg2[%c0_1, %c0_2, %c0_3] : memref<1x4x128xbf16, #tpu.memory_space<vmem>>, vector<1x4x128xbf16>
    %2 = vector.shape_cast %1 : vector<1x4x128xbf16> to vector<4x128xbf16>
    %cst = arith.constant dense<0.000000e+00> : vector<2x128xf32>
    %3 = tpu.matmul %0, %2, %cst {dimension_numbers = #tpu.dot_dimension_numbers<[1], [0], [0], [1], [0, 0, 1, 1], [], []>} : vector<2x4xbf16>, vector<4x128xbf16>, vector<2x128xf32> -> vector<2x128xf32>
    %c0_4 = arith.constant 0 : index
    %c0_5 = arith.constant 0 : index
    %4 = vector.load %arg5[%c0_4, %c0_5] : memref<2x4xbf16, #tpu.memory_space<vmem>>, vector<2x4xbf16>
    %c0_6 = arith.constant 0 : index
    %c0_7 = arith.constant 0 : index
    %c0_8 = arith.constant 0 : index
    %5 = vector.load %arg3[%c0_6, %c0_7, %c0_8] : memref<1x4x128xbf16, #tpu.memory_space<vmem>>, vector<1x4x128xbf16>
    %6 = vector.shape_cast %5 : vector<1x4x128xbf16> to vector<4x128xbf16>
    %cst_9 = arith.constant dense<0.000000e+00> : vector<2x128xf32>
    %7 = tpu.matmul %4, %6, %cst_9 {dimension_numbers = #tpu.dot_dimension_numbers<[1], [0], [0], [1], [0, 0, 1, 1], [], []>} : vector<2x4xbf16>, vector<4x128xbf16>, vector<2x128xf32> -> vector<2x128xf32>
    %8 = arith.addf %3, %7 : vector<2x128xf32>
    %c0_10 = arith.constant 0 : index
    %c0_11 = arith.constant 0 : index
    %9 = vector.load %arg6[%c0_10, %c0_11] : memref<2x1xf32, #tpu.memory_space<vmem>>, vector<2x1xf32>
    %10 = vector.broadcast %9 : vector<2x1xf32> to vector<2x128xf32>
    %11 = arith.addf %8, %10 : vector<2x128xf32>
    %cst_12 = arith.constant 0.000000e+00 : f32
    %12 = vector.broadcast %cst_12 : f32 to vector<2x128xf32>
    %13 = arith.maximumf %11, %12 : vector<2x128xf32>
    %c0_13 = arith.constant 0 : index
    %c0_14 = arith.constant 0 : index
    %14 = vector.load %arg7[%c0_13, %c0_14] : memref<2x1xf32, #tpu.memory_space<vmem>>, vector<2x1xf32>
    %15 = vector.broadcast %14 : vector<2x1xf32> to vector<2x128xf32>
    %16 = arith.mulf %13, %15 : vector<2x128xf32>
    %cst_15 = arith.constant dense<0.000000e+00> : vector<128xf32>
    %17 = vector.multi_reduction <add>, %16, %cst_15 [0] : vector<2x128xf32> to vector<128xf32>
    %18 = vector.shape_cast %17 : vector<128xf32> to vector<1x128xf32>
    %c0_16 = arith.constant 0 : index
    %c0_17 = arith.constant 0 : index
    %19 = vector.load %arg8[%c0_16, %c0_17] : memref<1x1xf32, #tpu.memory_space<vmem>>, vector<1x1xf32>
    %20 = vector.broadcast %19 : vector<1x1xf32> to vector<1x128xf32>
    %21 = arith.addf %18, %20 : vector<1x128xf32>
    %22 = arith.negf %21 : vector<1x128xf32>
    %23 = math.exp %22 : vector<1x128xf32>
    %cst_18 = arith.constant 1.000000e+00 : f32
    %24 = vector.broadcast %cst_18 : f32 to vector<1x128xf32>
    %25 = arith.addf %24, %23 : vector<1x128xf32>
    %26 = arith.divf %24, %25 : vector<1x128xf32>
    %c0_19 = arith.constant 0 : index
    %c0_20 = arith.constant 0 : index
    %c0_21 = arith.constant 0 : index
    %27 = vector.load %arg3[%c0_19, %c0_20, %c0_21] : memref<1x4x128xbf16, #tpu.memory_space<vmem>>, vector<1x4x128xbf16>
    %28 = vector.shape_cast %27 : vector<1x4x128xbf16> to vector<4x128xbf16>
    %29 = arith.extf %28 : vector<4x128xbf16> to vector<4x128xf32>
    %30 = vector.broadcast %26 : vector<1x128xf32> to vector<4x128xf32>
    %31 = arith.mulf %29, %30 : vector<4x128xf32>
    %c0_22 = arith.constant 0 : index
    %c0_23 = arith.constant 0 : index
    %c0_24 = arith.constant 0 : index
    %32 = vector.load %arg9[%c0_22, %c0_23, %c0_24] : memref<1x4x128xf32, #tpu.memory_space<vmem>>, vector<1x4x128xf32>
    %33 = vector.shape_cast %32 : vector<1x4x128xf32> to vector<4x128xf32>
    %34 = vector.shape_cast %31 : vector<4x128xf32> to vector<1x4x128xf32>
    tpu.vector_store %arg9[%c0_22, %c0_23, %c0_24], %34 {strides = array<i32>} : memref<1x4x128xf32, #tpu.memory_space<vmem>>, vector<1x4x128xf32>,
    return
  }
  func.func @transform_0(%arg0: i32, %arg1: i32) -> (i32, i32, i32) {
    %c0_i32 = arith.constant 0 : i32
    %c0_i32_0 = arith.constant 0 : i32
    return %arg0, %c0_i32, %arg1 : i32, i32, i32
  }
  func.func @transform_1(%arg0: i32, %arg1: i32) -> (i32, i32, i32) {
    %c0_i32 = arith.constant 0 : i32
    %c0_i32_0 = arith.constant 0 : i32
    return %arg0, %c0_i32, %arg1 : i32, i32, i32
  }
  func.func @transform_2(%arg0: i32, %arg1: i32) -> (i32, i32) {
    %c0_i32 = arith.constant 0 : i32
    %c0_i32_0 = arith.constant 0 : i32
    %c0_i32_1 = arith.constant 0 : i32
    return %c0_i32, %c0_i32_0 : i32, i32
  }
  func.func @transform_3(%arg0: i32, %arg1: i32) -> (i32, i32) {
    %c0_i32 = arith.constant 0 : i32
    %c0_i32_0 = arith.constant 0 : i32
    %c0_i32_1 = arith.constant 0 : i32
    return %c0_i32, %c0_i32_0 : i32, i32
  }
  func.func @transform_4(%arg0: i32, %arg1: i32) -> (i32, i32) {
    %c0_i32 = arith.constant 0 : i32
    %c0_i32_0 = arith.constant 0 : i32
    %c0_i32_1 = arith.constant 0 : i32
    return %c0_i32, %c0_i32_0 : i32, i32
  }
  func.func @transform_5(%arg0: i32, %arg1: i32) -> (i32, i32) {
    %c0_i32 = arith.constant 0 : i32
    %c0_i32_0 = arith.constant 0 : i32
    %c0_i32_1 = arith.constant 0 : i32
    return %c0_i32, %c0_i32_0 : i32, i32
  }
  func.func @transform_6(%arg0: i32, %arg1: i32) -> (i32, i32) {
    %c0_i32 = arith.constant 0 : i32
    %c0_i32_0 = arith.constant 0 : i32
    %c0_i32_1 = arith.constant 0 : i32
    return %c0_i32, %c0_i32_0 : i32, i32
  }
  func.func @transform_7(%arg0: i32, %arg1: i32) -> (i32, i32, i32) {
    %c0_i32 = arith.constant 0 : i32
    %c0_i32_0 = arith.constant 0 : i32
    return %arg0, %c0_i32, %arg1 : i32, i32, i32
  }
}

</mosaic_0001>

<llo_original>
// kernel: tpu_custom_call.1
$region0: #{tpu_custom_call.1}
  #allocation0 [shape = 'u32[]', space=smem, size = 0x4, offset = 0x4, fixed_abs, tag = 'smem constant byte address 0x4 - core index']
  #allocation1 [shape = 'u32[144,128]{1,0:T(1,128)}', space=vmem, size = 0x12000, scoped, tag = 'internal scratch']
  #allocation2 [shape = 'f32[1,1]{1,0:T(1,128)S(1)}', space=vmem, size = 0x200, scoped, tag = 'scoped memory for tpu_custom_call.1']
  %s0 = inlined_call_operand.vmem [shape: bf16[2,4,256], index: 0, kind: input, shape index: {}]
  %s1 = inlined_call_operand.hbm [shape: bf16[2,4,256], index: 1, kind: input, shape index: {}]
  %s2 = inlined_call_operand.vmem [shape: bf16[2,4], index: 2, kind: input, shape index: {}]
  %s3 = inlined_call_operand.vmem [shape: bf16[2,4], index: 3, kind: input, shape index: {}]
  %s4 = inlined_call_operand.vmem [shape: f32[2,1], index: 4, kind: input, shape index: {}]
  %s5 = inlined_call_operand.vmem [shape: f32[2,1], index: 5, kind: input, shape index: {}]
  %s6 = inlined_call_operand.<no memory space> [shape: f32[1,1], index: 6, kind: input, shape index: {}]
  %s7 = inlined_call_operand.hbm [shape: f32[2,4,256], index: 7, kind: output, shape index: {}]
  %s8 = sld [smem:[#allocation0]]
  $region65: #{tpu_custom_call.1} parent=0
    _
  %s10 = ssub.s32 1, %s8
  %s11 = scalar_select 0, %s10, %s8
  %v12 = vstv %s6
  %13 = vst [vmem:[#allocation2] sm:$0x1] %v12
  $region1: #{tpu_custom_call.1} parent=0
    #allocation3 [shape = 'u8[2048]{0}', space=vmem, size = 0x800, scoped, tag = 'input window, operand 1']
    #allocation4 [shape = 's32[2]{0}', space=sflag, size = 0x8, scoped, tag = 'scoped memory for tpu_custom_call.1']
    #allocation5 [shape = 's32[2]{0}', space=sflag, size = 0x8, scoped, tag = 'scoped memory for tpu_custom_call.1']
    #allocation6 [shape = 'u8[4096]{0}', space=vmem, size = 0x1000, scoped, tag = 'output window, operand 0']
    %14 = vsyncpa [#allocation4], 0
    %s15 = scalar_lea.sflag [#allocation4], 1
    %16 = vsyncpa %s15, 0
    %17 = vsyncpa [#allocation5], 0
    %s18 = scalar_lea.sflag [#allocation5], 1
    %19 = vsyncpa %s18, 0
    loop: start=0, step=1, limit=6
    $region2: #{tpu_custom_call.1} parent=1 // loop_pre_header
      _
    $region3: #{tpu_custom_call.1} parent=1 // loop_header
      %s21 = sphi 0, %s25
      %p22 = scmp.ge.s32.totalorder %s21, 6
      %s28 = sphi 0, %s40
      %s29 = sphi 0, %s36
      %s30 = sphi 0, %s28
      %s31 = sphi 0, %s29
      %s32 = sphi 0, %s30
      %s33 = sphi 0, %s31
      %s45 = sphi 0, %s47
      %s48 = sphi 0, %s45
      %s49 = sphi 0, %s48
      %s65 = sphi 0, %s49
      %s73 = sphi 0, %s75
      %s76 = sphi 0, %s73
      %s77 = sphi 0, %s76
      %s93 = sphi 0, %s77
      %s97 = sphi 0, %s97
      %s99 = sphi 0, %s97
      %s100 = sphi 0, %s99
      %s114 = sphi 0, %s100
      %s118 = sphi 0, %s118
      %s120 = sphi 0, %s118
      %s121 = sphi 0, %s120
      %s135 = sphi 0, %s121
      %s139 = sphi 0, %s139
      %s141 = sphi 0, %s139
      %s142 = sphi 0, %s141
      %s156 = sphi 0, %s142
      %s160 = sphi 0, %s160
      %s162 = sphi 0, %s160
      %s163 = sphi 0, %s162
      %s177 = sphi 0, %s163
      %s181 = sphi 0, %s181
      %s183 = sphi 0, %s181
      %s184 = sphi 0, %s183
      %s198 = sphi 0, %s184
      %s206 = sphi 0, %s208
      %s209 = sphi 0, %s206
      %s210 = sphi 0, %s209
      %s226 = sphi 0, %s210
    $region4: #{tpu_custom_call.1} parent=1 // loop_header_branch
      %24 = sbr.rel (%p22) target = $region8
    $region5: #{tpu_custom_call.1} parent=1 // loop_body
      %s26 = ssub.s32 %s21, 1
      %s27 = ssub.s32 %s21, 2
      %s34 = sadd.s32 1, %s29
      %p35 = scmp.ge.s32.totalorder %s34, 2
      %s36 = scalar_select %p35, 0, %s34
      %s37 = sadd.s32 1, %s28
      %s38 = scalar_select %p35, %s37, %s28
      %p39 = scmp.ge.s32.totalorder %s38, 2
      %s40 = scalar_select %p39, 0, %s38
      %s41 = ssub.s32 %s28, %s40
      %s42 = ssub.s32 %s29, %s36
      %s43 = sor.u32 %s41, %s42
      %p44 = scmp.eq.s32.totalorder %s43, 0
      %s46 = sadd.s32 %s45, 1
      %s47 = scalar_select %p44, %s45, %s46
      %p50 = pneg %p44
      %p51 = scmp.eq.s32.totalorder %s21, 3
      %p52 = por %p50, %p51
      %p53 = scmp.ne.s32.totalorder %s45, %s48
      %p54 = scmp.eq.s32.totalorder %s21, 0
      %p55 = por %p53, %p54
      %p56 = scmp.ne.s32.totalorder %s45, %s48
      %p57 = scmp.eq.s32.totalorder %s26, 3
      %p58 = por %p56, %p57
      %p59 = scmp.ne.s32.totalorder %s48, %s49
      %p60 = scmp.eq.s32.totalorder %s26, 0
      %p61 = por %p59, %p60
      %p62 = scmp.ne.s32.totalorder %s48, %s49
      %p63 = scmp.eq.s32.totalorder %s27, 3
      %p64 = por %p62, %p63
      %p66 = scmp.ne.s32.totalorder %s49, %s65
      %p67 = scmp.eq.s32.totalorder %s27, 0
      %p68 = por %p66, %p67
      %s69 = ssub.s32 %s28, %s40
      %s70 = ssub.s32 %s29, %s36
      %s71 = sor.u32 %s69, %s70
      %p72 = scmp.eq.s32.totalorder %s71, 0
      %s74 = sadd.s32 %s73, 1
      %s75 = scalar_select %p72, %s73, %s74
      %p78 = pneg %p72
      %p79 = scmp.eq.s32.totalorder %s21, 3
      %p80 = por %p78, %p79
      %p81 = scmp.ne.s32.totalorder %s73, %s76
      %p82 = scmp.eq.s32.totalorder %s21, 0
      %p83 = por %p81, %p82
      %p84 = scmp.ne.s32.totalorder %s73, %s76
      %p85 = scmp.eq.s32.totalorder %s26, 3
      %p86 = por %p84, %p85
      %p87 = scmp.ne.s32.totalorder %s76, %s77
      %p88 = scmp.eq.s32.totalorder %s26, 0
      %p89 = por %p87, %p88
      %p90 = scmp.ne.s32.totalorder %s76, %s77
      %p91 = scmp.eq.s32.totalorder %s27, 3
      %p92 = por %p90, %p91
      %p94 = scmp.ne.s32.totalorder %s77, %s93
      %p95 = scmp.eq.s32.totalorder %s27, 0
      %p96 = por %p94, %p95
      %s98 = sadd.s32 %s97, 1
      %p101 = scmp.eq.s32.totalorder %s21, 3
      %p102 = scmp.ne.s32.totalorder %s97, %s99
      %p103 = scmp.eq.s32.totalorder %s21, 0
      %p104 = por %p102, %p103
      %p105 = scmp.ne.s32.totalorder %s97, %s99
      %p106 = scmp.eq.s32.totalorder %s26, 3
      %p107 = por %p105, %p106
      %p108 = scmp.ne.s32.totalorder %s99, %s100
      %p109 = scmp.eq.s32.totalorder %s26, 0
      %p110 = por %p108, %p109
      %p111 = scmp.ne.s32.totalorder %s99, %s100
      %p112 = scmp.eq.s32.totalorder %s27, 3
      %p113 = por %p111, %p112
      %p115 = scmp.ne.s32.totalorder %s100, %s114
      %p116 = scmp.eq.s32.totalorder %s27, 0
      %p117 = por %p115, %p116
      %s119 = sadd.s32 %s118, 1
      %p122 = scmp.eq.s32.totalorder %s21, 3
      %p123 = scmp.ne.s32.totalorder %s118, %s120
      %p124 = scmp.eq.s32.totalorder %s21, 0
      %p125 = por %p123, %p124
      %p126 = scmp.ne.s32.totalorder %s118, %s120
      %p127 = scmp.eq.s32.totalorder %s26, 3
      %p128 = por %p126, %p127
      %p129 = scmp.ne.s32.totalorder %s120, %s121
      %p130 = scmp.eq.s32.totalorder %s26, 0
      %p131 = por %p129, %p130
      %p132 = scmp.ne.s32.totalorder %s120, %s121
      %p133 = scmp.eq.s32.totalorder %s27, 3
      %p134 = por %p132, %p133
      %p136 = scmp.ne.s32.totalorder %s121, %s135
      %p137 = scmp.eq.s32.totalorder %s27, 0
      %p138 = por %p136, %p137
      %s140 = sadd.s32 %s139, 1
      %p143 = scmp.eq.s32.totalorder %s21, 3
      %p144 = scmp.ne.s32.totalorder %s139, %s141
      %p145 = scmp.eq.s32.totalorder %s21, 0
      %p146 = por %p144, %p145
      %p147 = scmp.ne.s32.totalorder %s139, %s141
      %p148 = scmp.eq.s32.totalorder %s26, 3
      %p149 = por %p147, %p148
      %p150 = scmp.ne.s32.totalorder %s141, %s142
      %p151 = scmp.eq.s32.totalorder %s26, 0
      %p152 = por %p150, %p151
      %p153 = scmp.ne.s32.totalorder %s141, %s142
      %p154 = scmp.eq.s32.totalorder %s27, 3
      %p155 = por %p153, %p154
      %p157 = scmp.ne.s32.totalorder %s142, %s156
      %p158 = scmp.eq.s32.totalorder %s27, 0
      %p159 = por %p157, %p158
      %s161 = sadd.s32 %s160, 1
      %p164 = scmp.eq.s32.totalorder %s21, 3
      %p165 = scmp.ne.s32.totalorder %s160, %s162
      %p166 = scmp.eq.s32.totalorder %s21, 0
      %p167 = por %p165, %p166
      %p168 = scmp.ne.s32.totalorder %s160, %s162
      %p169 = scmp.eq.s32.totalorder %s26, 3
      %p170 = por %p168, %p169
      %p171 = scmp.ne.s32.totalorder %s162, %s163
      %p172 = scmp.eq.s32.totalorder %s26, 0
      %p173 = por %p171, %p172
      %p174 = scmp.ne.s32.totalorder %s162, %s163
      %p175 = scmp.eq.s32.totalorder %s27, 3
      %p176 = por %p174, %p175
      %p178 = scmp.ne.s32.totalorder %s163, %s177
      %p179 = scmp.eq.s32.totalorder %s27, 0
      %p180 = por %p178, %p179
      %s182 = sadd.s32 %s181, 1
      %p185 = scmp.eq.s32.totalorder %s21, 3
      %p186 = scmp.ne.s32.totalorder %s181, %s183
      %p187 = scmp.eq.s32.totalorder %s21, 0
      %p188 = por %p186, %p187
      %p189 = scmp.ne.s32.totalorder %s181, %s183
      %p190 = scmp.eq.s32.totalorder %s26, 3
      %p191 = por %p189, %p190
      %p192 = scmp.ne.s32.totalorder %s183, %s184
      %p193 = scmp.eq.s32.totalorder %s26, 0
      %p194 = por %p192, %p193
      %p195 = scmp.ne.s32.totalorder %s183, %s184
      %p196 = scmp.eq.s32.totalorder %s27, 3
      %p197 = por %p195, %p196
      %p199 = scmp.ne.s32.totalorder %s184, %s198
      %p200 = scmp.eq.s32.totalorder %s27, 0
      %p201 = por %p199, %p200
      %s202 = ssub.s32 %s28, %s40
      %s203 = ssub.s32 %s29, %s36
      %s204 = sor.u32 %s202, %s203
      %p205 = scmp.eq.s32.totalorder %s204, 0
      %s207 = sadd.s32 %s206, 1
      %s208 = scalar_select %p205, %s206, %s207
      %p211 = pneg %p205
      %p212 = scmp.eq.s32.totalorder %s21, 3
      %p213 = por %p211, %p212
      %p214 = scmp.ne.s32.totalorder %s206, %s209
      %p215 = scmp.eq.s32.totalorder %s21, 0
      %p216 = por %p214, %p215
      %p217 = scmp.ne.s32.totalorder %s206, %s209
      %p218 = scmp.eq.s32.totalorder %s26, 3
      %p219 = por %p217, %p218
      %p220 = scmp.ne.s32.totalorder %s209, %s210
      %p221 = scmp.eq.s32.totalorder %s26, 0
      %p222 = por %p220, %p221
      %p223 = scmp.ne.s32.totalorder %s209, %s210
      %p224 = scmp.eq.s32.totalorder %s27, 3
      %p225 = por %p223, %p224
      %p227 = scmp.ne.s32.totalorder %s210, %s226
      %p228 = scmp.eq.s32.totalorder %s27, 0
      %p229 = por %p227, %p228
      %p230 = scmp.le.s32.totalorder 1, %s21
      %p231 = scmp.lt.s32.totalorder %s21, 5
      %p232 = pnand %p230, %p231
      %p233 = pneg %p232
      // Predicated region
      $region9: #{tpu_custom_call.1} parent=5 // pred_check
        _
      $region10: #{tpu_custom_call.1} parent=5 // pred_check_branch
        %235 = sbr.rel (%p232) target = $region12
      $region11: #{tpu_custom_call.1} parent=5 // pred_region
        %s236 = ssub.s32 %s21, 1
        // Predicated region
        $region13: #{tpu_custom_call.1} parent=11 // pred_check
          %p237 = pneg %p110
        $region14: #{tpu_custom_call.1} parent=11 // pred_check_branch
          %239 = sbr.rel (%p237) target = $region16
        $region15: #{tpu_custom_call.1} parent=11 // pred_region
          _
        $region16: #{tpu_custom_call.1} parent=11 // pred_fallthru
          _
        // Predicated region
        $region17: #{tpu_custom_call.1} parent=11 // pred_check
          %p240 = pneg %p131
        $region18: #{tpu_custom_call.1} parent=11 // pred_check_branch
          %242 = sbr.rel (%p240) target = $region20
        $region19: #{tpu_custom_call.1} parent=11 // pred_region
          _
        $region20: #{tpu_custom_call.1} parent=11 // pred_fallthru
          _
        // Predicated region
        $region21: #{tpu_custom_call.1} parent=11 // pred_check
          %p243 = pneg %p152
        $region22: #{tpu_custom_call.1} parent=11 // pred_check_branch
          %245 = sbr.rel (%p243) target = $region24
        $region23: #{tpu_custom_call.1} parent=11 // pred_region
          _
        $region24: #{tpu_custom_call.1} parent=11 // pred_fallthru
          _
        // Predicated region
        $region25: #{tpu_custom_call.1} parent=11 // pred_check
          %p246 = pneg %p173
        $region26: #{tpu_custom_call.1} parent=11 // pred_check_branch
          %248 = sbr.rel (%p246) target = $region28
        $region27: #{tpu_custom_call.1} parent=11 // pred_region
          _
        $region28: #{tpu_custom_call.1} parent=11 // pred_fallthru
          _
        // Predicated region
        $region29: #{tpu_custom_call.1} parent=11 // pred_check
          %p249 = pneg %p194
        $region30: #{tpu_custom_call.1} parent=11 // pred_check_branch
          %251 = sbr.rel (%p249) target = $region32
        $region31: #{tpu_custom_call.1} parent=11 // pred_region
          _
        $region32: #{tpu_custom_call.1} parent=11 // pred_fallthru
          _
      $region12: #{tpu_custom_call.1} parent=5 // pred_fallthru
        _
      %p252 = scmp.lt.s32.totalorder %s21, 4
      // Predicated region
      $region33: #{tpu_custom_call.1} parent=5 // pred_check
        %p253 = pneg %p252
      $region34: #{tpu_custom_call.1} parent=5 // pred_check_branch
        %255 = sbr.rel (%p253) target = $region36
      $region35: #{tpu_custom_call.1} parent=5 // pred_region
        // Predicated region
        $region37: #{tpu_custom_call.1} parent=35 // pred_check
          %p256 = pneg %p55
        $region38: #{tpu_custom_call.1} parent=35 // pred_check_branch
          %258 = sbr.rel (%p256) target = $region40
        $region39: #{tpu_custom_call.1} parent=35 // pred_region
          %p259 = scmp.lt.s32.totalorder %s28, 1
          %s260 = scalar_select %p259, %s28, 1
          %p261 = scmp.lt.s32.totalorder %s29, 1
          %s262 = scalar_select %p261, %s29, 1
          %s263 = smul.addr %s260, 2
          %s264 = sadd.s32 %s262, %s263
          %s265 = smul.addr %s264, 2
          %s266 = scalar_lea.vmem %s0, %s265
        $region40: #{tpu_custom_call.1} parent=35 // pred_fallthru
          _
        // Predicated region
        $region41: #{tpu_custom_call.1} parent=35 // pred_check
          %p267 = pneg %p83
        $region42: #{tpu_custom_call.1} parent=35 // pred_check_branch
          %269 = sbr.rel (%p267) target = $region44
        $region43: #{tpu_custom_call.1} parent=35 // pred_region
          %s270 = sand.u32 %s73, 1
          %s271 = scalar_lea.sflag [#allocation4], %s270
          %s272 = sand.u32 %s73, 1
          %s273 = smul.addr %s272, 2
          %s274 = scalar_lea.vmem [#allocation3], %s273
          %s276 = ssub.s32 32, 32
          %277 = vsyncadd %s271, %s276
          %s278 = smul.addr %s28, 2
          %s279 = sadd.s32 %s29, %s278
          %s280 = smul.addr %s279, 32
          %s281 = scalar_lea.hbm %s1, %s280
          %s283 = sshll.u32 %s274, 4
          %s284 = int_to_ptr.vmem [resolvable:$true] %s283
          %286 = dma.hbm_to_vmem [thread:$0]  %s281, 32, %s284, %s271
        $region44: #{tpu_custom_call.1} parent=35 // pred_fallthru
          _
      $region36: #{tpu_custom_call.1} parent=5 // pred_fallthru
        _
      %p287 = scmp.le.s32.totalorder 1, %s21
      %p288 = scmp.lt.s32.totalorder %s21, 5
      %p289 = pnand %p287, %p288
      %p290 = pneg %p289
      // Predicated region
      $region45: #{tpu_custom_call.1} parent=5 // pred_check
        _
      $region46: #{tpu_custom_call.1} parent=5 // pred_check_branch
        %292 = sbr.rel (%p289) target = $region48
      $region47: #{tpu_custom_call.1} parent=5 // pred_region
        %s293 = ssub.s32 %s21, 1
        %s294 = sand.u32 %s76, 1
        %s295 = scalar_lea.sflag [#allocation4], %s294
        %s296 = sand.u32 %s76, 1
        %s297 = smul.addr %s296, 2
        %s298 = scalar_lea.vmem [#allocation3], %s297
        // Predicated region
        $region49: #{tpu_custom_call.1} parent=47 // pred_check
          %p299 = pneg %p89
        $region50: #{tpu_custom_call.1} parent=47 // pred_check_branch
          %301 = sbr.rel (%p299) target = $region52
        $region51: #{tpu_custom_call.1} parent=47 // pred_region
          %302 = dma.done %s295, 32
        $region52: #{tpu_custom_call.1} parent=47 // pred_fallthru
          _
        %p303 = scmp.lt.s32.totalorder %s30, 1
        %s304 = scalar_select %p303, %s30, 1
        %p305 = scmp.lt.s32.totalorder %s31, 1
        %s306 = scalar_select %p305, %s31, 1
        %s307 = smul.addr %s304, 2
        %s308 = sadd.s32 %s306, %s307
        %s309 = smul.addr %s308, 2
        %s310 = scalar_lea.vmem %s0, %s309
        %p311 = pneg %p61
        %p312 = pneg %p58
        %s313 = sand.u32 %s76, 1
        %s314 = scalar_lea.sflag [#allocation4], %s313
        %s315 = sand.u32 %s76, 1
        %s316 = smul.addr %s315, 2
        %s317 = scalar_lea.vmem [#allocation3], %s316
        %p318 = pneg %p89
        %p319 = pneg %p86
        %p320 = pneg %p110
        %p321 = pneg %p107
        %p322 = pneg %p131
        %p323 = pneg %p128
        %p324 = pneg %p152
        %p325 = pneg %p149
        %p326 = pneg %p173
        %p327 = pneg %p170
        %p328 = pneg %p194
        %p329 = pneg %p191
        %p330 = pneg %p222
        %p331 = pneg %p219
        %s332 = sand.u32 %s209, 1
        %s333 = scalar_lea.sflag [#allocation5], %s332
        %s334 = sand.u32 %s209, 1
        %s335 = smul.addr %s334, 4
        %s336 = scalar_lea.vmem [#allocation6], %s335
        %p337 = scmp.lt.s32.totalorder %s30, 1
        %s338 = scalar_select %p337, %s30, 1
        %p339 = scmp.lt.s32.totalorder %s31, 1
        %s340 = scalar_select %p339, %s31, 1
        %s341 = smul.addr %s338, 2
        %s342 = sadd.s32 %s340, %s341
        %s343 = smul.addr %s342, 2
        %s344 = scalar_lea.vmem %s0, %s343
        %v346 = vld [vmem:[%s2] sm:$0x1]
        %v347 = vld [vmem:[%s344] sm:$0x3]
        %v348 = vld [vmem:[%s3] sm:$0x1]
        %v349 = vld [vmem:[%s298] sm:$0x3]
        %vm350 = vcmask 31744
        %v352 = vsel %vm350, %v348, 0
        %vm354 = vcmask 1041408
        %v356 = vsel %vm354, %v349, 0
        %358 = vmatprep.subr.bf16.mxu0 0
        %359 = vmatpush1.bf16.msra.mxu0 %v356
        %360 = vmatprep.subr.bf16.mxu0 0
        %361 = vmatpush1.bf16.msra.mxu0 0
        %362 = vmatprep.subr.bf16.mxu0 0
        %363 = vmatpush1.bf16.msra.mxu0 0
        %364 = vmatprep.subr.bf16.mxu0 0
        %365 = vmatpush1.bf16.msra.mxu0 0
        %366 = vmatprep.subr.bf16.mxu0 0
        %367 = vmatpush1.bf16.msra.mxu0 0
        %368 = vmatprep.subr.bf16.mxu0 0
        %369 = vmatpush1.bf16.msra.mxu0 0
        %370 = vmatprep.subr.bf16.mxu0 0
        %371 = vmatpush1.bf16.msra.mxu0 0
        %372 = vmatprep.subr.bf16.mxu0 0
        %373 = vmatpush1.bf16.msra.mxu0 0
        %374 = vmatprep.subr.bf16.mxu0 0
        %375 = vmatpush1.bf16.msra.mxu0 0
        %376 = vmatprep.subr.bf16.mxu0 0
        %377 = vmatpush1.bf16.msra.mxu0 0
        %378 = vmatprep.subr.bf16.mxu0 0
        %379 = vmatpush1.bf16.msra.mxu0 0
        %380 = vmatprep.subr.bf16.mxu0 0
        %381 = vmatpush1.bf16.msra.mxu0 0
        %382 = vmatprep.subr.bf16.mxu0 0
        %383 = vmatpush1.bf16.msra.mxu0 0
        %384 = vmatprep.subr.bf16.mxu0 0
        %385 = vmatpush1.bf16.msra.mxu0 0
        %386 = vmatprep.subr.bf16.mxu0 0
        %387 = vmatpush1.bf16.msra.mxu0 0
        %388 = vmatprep.subr.bf16.mxu0 0
        %389 = vmatpush1.bf16.msra.mxu0 0
        %390 = vmatprep.mubr.bf16.mxu0 0
        %391 = vmatmul.mubr.bf16.gmra.mrb[0].mxu0 %v352
        %v392 = vpop.f32.mrb[0].mxu0
        %v393 = vadd.f32 0.0, %v392
        %v394 = vpop.f32.mrb[0].mxu0
        %v395 = vpop.f32.mrb[0].mxu0
        %v396 = vpop.f32.mrb[0].mxu0
        %397 = vdwg.mxu0
        %v399 = vsel %vm350, %v346, 0
        %v402 = vsel %vm354, %v347, 0
        %404 = vmatprep.subr.bf16.mxu0 0
        %405 = vmatpush1.bf16.msra.mxu0 %v402
        %406 = vmatprep.subr.bf16.mxu0 0
        %407 = vmatpush1.bf16.msra.mxu0 0
        %408 = vmatprep.subr.bf16.mxu0 0
        %409 = vmatpush1.bf16.msra.mxu0 0
        %410 = vmatprep.subr.bf16.mxu0 0
        %411 = vmatpush1.bf16.msra.mxu0 0
        %412 = vmatprep.subr.bf16.mxu0 0
        %413 = vmatpush1.bf16.msra.mxu0 0
        %414 = vmatprep.subr.bf16.mxu0 0
        %415 = vmatpush1.bf16.msra.mxu0 0
        %416 = vmatprep.subr.bf16.mxu0 0
        %417 = vmatpush1.bf16.msra.mxu0 0
        %418 = vmatprep.subr.bf16.mxu0 0
        %419 = vmatpush1.bf16.msra.mxu0 0
        %420 = vmatprep.subr.bf16.mxu0 0
        %421 = vmatpush1.bf16.msra.mxu0 0
        %422 = vmatprep.subr.bf16.mxu0 0
        %423 = vmatpush1.bf16.msra.mxu0 0
        %424 = vmatprep.subr.bf16.mxu0 0
        %425 = vmatpush1.bf16.msra.mxu0 0
        %426 = vmatprep.subr.bf16.mxu0 0
        %427 = vmatpush1.bf16.msra.mxu0 0
        %428 = vmatprep.subr.bf16.mxu0 0
        %429 = vmatpush1.bf16.msra.mxu0 0
        %430 = vmatprep.subr.bf16.mxu0 0
        %431 = vmatpush1.bf16.msra.mxu0 0
        %432 = vmatprep.subr.bf16.mxu0 0
        %433 = vmatpush1.bf16.msra.mxu0 0
        %434 = vmatprep.subr.bf16.mxu0 0
        %435 = vmatpush1.bf16.msra.mxu0 0
        %436 = vmatprep.mubr.bf16.mxu0 0
        %437 = vmatmul.mubr.bf16.gmra.mrb[0].mxu0 %v399
        %v438 = vpop.f32.mrb[0].mxu0
        %v439 = vadd.f32 %v393, %v438
        %v440 = vpop.f32.mrb[0].mxu0
        %v441 = vpop.f32.mrb[0].mxu0
        %v442 = vpop.f32.mrb[0].mxu0
        %443 = vdwg.mxu0
        %v444 = vld [vmem:[%s4] sm:$0x3]
        %446 = vset.pattern.permute.xlu0 0
        %447 = vperm.xlu0 %446, %v444
        %v448 = vpop.permute.xlu0 %447
        %v450 = vadd.f32 %v439, %v448
        %v451 = vmax.f32 %v450, 0.0
        %v452 = vld [vmem:[%s5] sm:$0x3]
        %454 = vset.pattern.permute.xlu0 0
        %455 = vperm.xlu0 %454, %v452
        %v456 = vpop.permute.xlu0 %455
        %v458 = vmul.f32 %v451, %v456
        %v459 = vsel %vm354, %v458, 0.0
        %v460 = vrot.slane %v459, 4
        %v461 = vadd.f32 %v459, %v460
        %v462 = vrot.slane %v461, 2
        %v463 = vadd.f32 %v461, %v462
        %v464 = vrot.slane %v463, 1
        %v465 = vadd.f32 %v463, %v464
        %v466 = vld [vmem:[#allocation2] sm:$0x1]
        %468 = vset.pattern.permute.xlu0 0
        %469 = vperm.xlu0 %468, %v466
        %v470 = vpop.permute.xlu0 %469
        %v472 = vlaneseq
        %v473 = vshrl.u32 %v472, 7
        %v474 = vsub.s32 0, %v473
        %v475 = vrot.slane %v470, %v474
        %v476 = vadd.f32 %v465, %v475
        %v477 = vxor.u32 %v476, 2147483648
        %v478 = vmul.f32 %v477, 1.442695
        %v479 = vpow.pop %v478
        %v480 = vadd.f32 %v479, 1.0
        %v481 = vrcp.pop %v480
        %v482 = vmul.f32 1.0, %v481
        %v483 = vunpack.c.l.bf16 %v349
        %v484 = vmul.f32 %v483, %v482
        %485 = vst [vmem:[%s336] sm:$0xf] %v484
        %s486 = sand.u32 %s209, 1
        %s487 = scalar_lea.sflag [#allocation5], %s486
        %s488 = sand.u32 %s209, 1
        %s489 = smul.addr %s488, 4
        %s490 = scalar_lea.vmem [#allocation6], %s489
        // Predicated region
        $region53: #{tpu_custom_call.1} parent=47 // pred_check
          %p491 = pneg %p219
        $region54: #{tpu_custom_call.1} parent=47 // pred_check_branch
          %493 = sbr.rel (%p491) target = $region56
        $region55: #{tpu_custom_call.1} parent=47 // pred_region
          %s495 = ssub.s32 64, 64
          %496 = vsyncadd %s487, %s495
          %s497 = smul.addr %s30, 2
          %s498 = sadd.s32 %s31, %s497
          %s499 = smul.addr %s498, 64
          %s500 = scalar_lea.hbm %s7, %s499
          %s502 = sshll.u32 %s490, 4
          %s503 = int_to_ptr.vmem [resolvable:$true] %s502
          %505 = dma.vmem_to_hbm [thread:$0]  %s503, 64, %s500, %s487
        $region56: #{tpu_custom_call.1} parent=47 // pred_fallthru
          _
      $region48: #{tpu_custom_call.1} parent=5 // pred_fallthru
        _
      %p506 = scmp.le.s32.totalorder 2, %s21
      // Predicated region
      $region57: #{tpu_custom_call.1} parent=5 // pred_check
        %p507 = pneg %p506
      $region58: #{tpu_custom_call.1} parent=5 // pred_check_branch
        %509 = sbr.rel (%p507) target = $region60
      $region59: #{tpu_custom_call.1} parent=5 // pred_region
        %s510 = ssub.s32 %s21, 2
        // Predicated region
        $region61: #{tpu_custom_call.1} parent=59 // pred_check
          %p511 = pneg %p225
        $region62: #{tpu_custom_call.1} parent=59 // pred_check_branch
          %513 = sbr.rel (%p511) target = $region64
        $region63: #{tpu_custom_call.1} parent=59 // pred_region
          %s514 = sand.u32 %s210, 1
          %s515 = scalar_lea.sflag [#allocation5], %s514
          %s516 = sand.u32 %s210, 1
          %s517 = smul.addr %s516, 4
          %s518 = scalar_lea.vmem [#allocation6], %s517
          %519 = dma.done %s515, 64
        $region64: #{tpu_custom_call.1} parent=59 // pred_fallthru
          _
      $region60: #{tpu_custom_call.1} parent=5 // pred_fallthru
        _
    $region6: #{tpu_custom_call.1} parent=1 // loop_footer
      %s25 = sadd.s32 1, %s21
    $region7: #{tpu_custom_call.1} parent=1 // loop_footer_branch
      %20 = sbr.rel target = $region3
    $region8: #{tpu_custom_call.1} parent=1 // loop_exit
      _
    %520 = vsyncpa [#allocation4], 1
    %s521 = scalar_lea.sflag [#allocation4], 1
    %522 = vsyncpa %s521, 1
    %523 = vsyncpa [#allocation5], 1
    %s524 = scalar_lea.sflag [#allocation5], 1
    %525 = vsyncpa %s524, 1

</llo_original>
